<compile_context>
chip_gen: v5e
topology: v5e:2x2
jax: 0.10.0
libtpu: 0.0.40
codegen_flags: <defaults>
</compile_context>

<pallas_src>
import functools

import jax
import jax.numpy as jnp
from jax.experimental import pallas as pl
from jax.experimental.pallas import tpu as pltpu

GIN_EPS = 0.0  # GINConv default eps (train_eps=False)


def _round_up(v, m):
    return (v + m - 1) // m * m


# ----------------------------------------------------------------------------
# Fused kernel: all GIN layers (static unrolled loop) + batched softmax pooling
# ----------------------------------------------------------------------------
def _make_kernel(num_layers):
    def kernel(m_ref, x0_ref, w1_ref, b1_ref, w2_ref, b2_ref,
               scale_ref, shift_ref, mask_ref, wa_ref, ba_ref,
               wo_ref, bo_ref, o_ref):
        x = x0_ref[...]                                   # bf16 [N_pad, P]
        m = m_ref[...]                                    # bf16 [N_pad, N_pad]

        # ---- GIN layers (weights resident in VMEM; tiny vs. M) ----
        for l in range(num_layers):
            # (A + (1+eps) I) @ x  -- integer counts are exact in bf16, f32 acc on MXU
            agg = jnp.dot(m, x, preferred_element_type=jnp.float32)       # [N, P] f32
            # MLP: Linear -> ReLU -> Linear (bf16 operands, f32 accumulation)
            h = jnp.dot(agg.astype(jnp.bfloat16), w1_ref[l],
                        preferred_element_type=jnp.float32) + b1_ref[l]
            h = jnp.maximum(h, 0.0)
            h = jnp.dot(h.astype(jnp.bfloat16), w2_ref[l],
                        preferred_element_type=jnp.float32) + b2_ref[l]
            # eval-mode BatchNorm1d fused to scale/shift, then ReLU (dropout = identity)
            x = jnp.maximum(h * scale_ref[l] + shift_ref[l], 0.0).astype(jnp.bfloat16)

        # ---- attention pooling, batched over all (graph, cluster) rows ----
        # scores_bc[b*C+c, n] = sum_h Wa[h, c] * x[n, h] + ba[c]   (wa pre-tiled to [P, B*C])
        scores_bc = jax.lax.dot_general(
            wa_ref[...], x, (((0,), (1,)), ((), ())),
            preferred_element_type=jnp.float32) + ba_ref[...]             # [B*C, N]

        maskf = mask_ref[...].astype(jnp.float32)                         # [B*C, N] 0/1
        neg = jnp.float32(-1e30)
        # per-(graph, cluster) masked max -> no cross-graph underflow
        mmax = jnp.max(jnp.where(maskf > 0.0, scores_bc, neg),
                       axis=1, keepdims=True)                             # [B*C, 1]
        # mask BEFORE exp so off-graph / padded nodes are exact zeros (no inf*0)
        e = jnp.exp(jnp.where(maskf > 0.0, scores_bc - mmax, neg))        # [B*C, N]
        denom = jnp.sum(e, axis=1, keepdims=True)                         # [B*C, 1]

        pooled = jnp.dot(e.astype(jnp.bfloat16), x,
                         preferred_element_type=jnp.float32)              # [B*C, P]
        pooled = pooled / jnp.maximum(denom, 1e-30)       # guard empty graphs (no NaN)

        out = jnp.dot(pooled.astype(jnp.bfloat16), wo_ref[...],
                      preferred_element_type=jnp.float32) + bo_ref[...]   # [B*C, O_pad]
        o_ref[...] = out                                  # lane-dense store
    return kernel


# ----------------------------------------------------------------------------
# Wrapper: padding / packing glue + single pallas_call
# ----------------------------------------------------------------------------
def gin_encoder_forward(params, deg_idx, edge_index, batch, num_graphs):
    x0 = params["embed"][deg_idx].astype(jnp.float32)     # [N, F] embedding gather (glue)
    n, f_dim = x0.shape
    hidden = params["layers"][0]["w2"].shape[1]
    num_layers = len(params["layers"])
    num_clusters = params["wa"].shape[1]
    out_dim = params["wo"].shape[1]

    p_dim = _round_up(max(f_dim, hidden), 128)            # lane-padded feature width
    n_pad = _round_up(n, 128)                             # lane-padded node count
    o_pad = _round_up(out_dim, 128)                       # lane-dense output width
    bc = num_graphs * num_clusters

    # Dense aggregation matrix M = A + (1+eps) I, stored bf16 (integer counts: exact).
    # TODO(synk): for large graphs replace the dense O(N^2) M with a sparse /
    # row-tiled aggregation (stream M row blocks over a grid axis, split across
    # TCs on v7x); dense-resident is the right choice at these sizes.
    src, dst = edge_index[0], edge_index[1]
    adj = jnp.zeros((n, n), jnp.float32).at[dst, src].add(1.0)
    m = adj + (1.0 + GIN_EPS) * jnp.eye(n, dtype=jnp.float32)
    m = jnp.pad(m, ((0, n_pad - n), (0, n_pad - n))).astype(jnp.bfloat16)

    def pad2(a, r, c):
        return jnp.pad(a, ((0, r - a.shape[0]), (0, c - a.shape[1])))

    x0p = pad2(x0, n_pad, p_dim).astype(jnp.bfloat16)

    w1 = jnp.stack([pad2(l["w1"], p_dim, p_dim) for l in params["layers"]]).astype(jnp.bfloat16)
    b1 = jnp.stack([pad2(l["b1"], 1, p_dim) for l in params["layers"]])
    w2 = jnp.stack([pad2(l["w2"], p_dim, p_dim) for l in params["layers"]]).astype(jnp.bfloat16)
    b2 = jnp.stack([pad2(l["b2"], 1, p_dim) for l in params["layers"]])
    scale = jnp.stack([pad2(l["scale"], 1, p_dim) for l in params["layers"]])
    shift = jnp.stack([pad2(l["shift"], 1, p_dim) for l in params["layers"]])

    # Pre-tile attention weights/bias to [P, B*C] / [B*C, 1]: removes the old
    # 0/1 replication matmul (and its input) from the kernel.
    wa_bc = jnp.tile(pad2(params["wa"], p_dim, num_clusters),
                     (1, num_graphs)).astype(jnp.bfloat16)          # [P, B*C]
    ba_bc = jnp.tile(params["ba_t"], (num_graphs, 1))                # [B*C, 1]
    wo = pad2(params["wo"], p_dim, o_pad).astype(jnp.bfloat16)       # [P, O_pad]
    bo = pad2(params["bo"], 1, o_pad)                                # [1, O_pad]

    # graph membership, expanded to [B*C, N_pad]; row b*C+c = mask of graph b (bf16 0/1 exact)
    mask = (batch[None, :] == jnp.arange(num_graphs)[:, None]).astype(jnp.float32)
    mask = jnp.pad(mask, ((0, 0), (0, n_pad - n)))
    mask_bc = jnp.repeat(mask, num_clusters, axis=0).astype(jnp.bfloat16)

    inputs = (m, x0p, w1, b1, w2, b2, scale, shift, mask_bc, wa_bc, ba_bc, wo, bo)

    nbytes = lambda a: a.size * a.dtype.itemsize
    in_bytes = sum(nbytes(a) for a in inputs)
    out_bytes = bc * o_pad * 4
    # generous estimate of in-kernel f32 intermediates (agg / h / score slabs)
    interm_bytes = 3 * n_pad * p_dim * 4 + 3 * bc * n_pad * 4
    vmem_limit = int(min(max(in_bytes + out_bytes + interm_bytes + (8 << 20), 16 << 20),
                         64 << 20))

    flops = (num_layers * (2 * n_pad * n_pad * p_dim + 4 * n_pad * p_dim * p_dim)
             + 2 * p_dim * bc * n_pad + 2 * bc * n_pad * p_dim + 2 * bc * p_dim * o_pad)
    cost = pl.CostEstimate(flops=flops, transcendentals=bc * n_pad,
                           bytes_accessed=in_bytes + out_bytes)

    vmem_spec = pl.BlockSpec(memory_space=pltpu.MemorySpace.VMEM)
    out = pl.pallas_call(
        _make_kernel(num_layers),
        out_shape=jax.ShapeDtypeStruct((bc, o_pad), jnp.float32),
        in_specs=[vmem_spec] * len(inputs),
        out_specs=vmem_spec,
        compiler_params=pltpu.CompilerParams(vmem_limit_bytes=vmem_limit),
        cost_estimate=cost,
    )(*inputs)

    return out[:, :out_dim].reshape(num_graphs, num_clusters, out_dim)


# ----------------------------------------------------------------------------
# Pure-JAX reference (f32, HIGHEST precision) for correctness check
# ----------------------------------------------------------------------------
def reference_forward(params, deg_idx, edge_index, batch, num_graphs):
    import numpy as np
    hp = functools.partial(jnp.dot, precision=jax.lax.Precision.HIGHEST)
    x = params["embed"][deg_idx].astype(jnp.float32)
    n = x.shape[0]
    src, dst = edge_index[0], edge_index[1]
    adj = jnp.zeros((n, n), jnp.float32).at[dst, src].add(1.0)
    m = adj + (1.0 + GIN_EPS) * jnp.eye(n, dtype=jnp.float32)
    for lyr in params["layers"]:
        h = hp(m, x)
        h = jnp.maximum(hp(h, lyr["w1"]) + lyr["b1"], 0.0)
        h = hp(h, lyr["w2"]) + lyr["b2"]
        x = jnp.maximum(h * lyr["scale"] + lyr["shift"], 0.0)
    scores = hp(x, params["wa"]) + params["ba_t"].T                # [N, C]
    batch_np = np.asarray(batch)
    outs = []
    for b in range(num_graphs):
        idx = np.where(batch_np == b)[0]
        x_i = x[idx]
        s_i = scores[idx]
        s_i = s_i - jnp.max(s_i, axis=0, keepdims=True)
        w_i = jnp.exp(s_i) / jnp.sum(jnp.exp(s_i), axis=0, keepdims=True)
        c_i = hp(w_i.T, x_i)
        outs.append(hp(c_i, params["wo"]) + params["bo"])
    return jnp.stack(outs, axis=0)


# ----------------------------------------------------------------------------
# Deterministic parameter init + example data
# ----------------------------------------------------------------------------
def init_params(key, max_degree, node_embed_dim, hidden_dim, num_layers,
                num_clusters, output_dim):
    keys = jax.random.split(key, 5 + 6 * num_layers)   # 1 embed + 6/layer + 4 heads
    ki = iter(keys)
    params = {
        "embed": jax.random.normal(next(ki), (max_degree + 1, node_embed_dim),
                                   jnp.float32) * 0.5,
        "layers": [],
    }
    in_dim = node_embed_dim
    bn_eps = 1e-5
    for _ in range(num_layers):
        w1 = jax.random.normal(next(ki), (in_dim, hidden_dim), jnp.float32) * 0.2
        b1 = jax.random.normal(next(ki), (1, hidden_dim), jnp.float32) * 0.1
        w2 = jax.random.normal(next(ki), (hidden_dim, hidden_dim), jnp.float32) * 0.2
        b2 = jax.random.normal(next(ki), (1, hidden_dim), jnp.float32) * 0.1
        gamma = 1.0 + 0.1 * jax.random.normal(next(ki), (1, hidden_dim), jnp.float32)
        beta = 0.1 * jax.random.normal(next(ki), (1, hidden_dim), jnp.float32)
        running_mean = jnp.zeros((1, hidden_dim), jnp.float32)
        running_var = jnp.ones((1, hidden_dim), jnp.float32)
        scale = gamma / jnp.sqrt(running_var + bn_eps)
        shift = beta - running_mean * scale
        params["layers"].append(
            {"w1": w1, "b1": b1, "w2": w2, "b2": b2, "scale": scale, "shift": shift})
        in_dim = hidden_dim
    params["wa"] = jax.random.normal(next(ki), (hidden_dim, num_clusters), jnp.float32) * 0.2
    params["ba_t"] = jax.random.normal(next(ki), (num_clusters, 1), jnp.float32) * 0.1
    params["wo"] = jax.random.normal(next(ki), (hidden_dim, output_dim), jnp.float32) * 0.2
    params["bo"] = jax.random.normal(next(ki), (1, output_dim), jnp.float32) * 0.1
    return params


def make_example_graph():
    # 2 graphs: ring of 6 nodes (0..5) and ring of 10 nodes (6..15) with 2 chords.
    edges = []
    for i in range(6):
        a, b = i, (i + 1) % 6
        edges += [(a, b), (b, a)]
    for i in range(10):
        a, b = 6 + i, 6 + (i + 1) % 10
        edges += [(a, b), (b, a)]
    for a, b in [(6, 10), (8, 13)]:
        edges += [(a, b), (b, a)]
    edge_index = jnp.asarray(edges, dtype=jnp.int32).T              # [2, E]
    batch = jnp.asarray([0] * 6 + [1] * 10, dtype=jnp.int32)        # [N]
    n = batch.shape[0]
    deg = jnp.zeros((n,), jnp.int32).at[edge_index[1]].add(1)       # in-degree
    return edge_index, batch, deg


if __name__ == "__main__":
    MAX_DEGREE = 8
    NODE_EMBED_DIM = 32
    HIDDEN_DIM = 32
    NUM_LAYERS = 2
    NUM_CLUSTERS = 4
    OUTPUT_DIM = 16
    # num_heads = 1 (module default); >1 head-mean path not exercised.

    key = jax.random.PRNGKey(0)
    params = init_params(key, MAX_DEGREE, NODE_EMBED_DIM, HIDDEN_DIM, NUM_LAYERS,
                         NUM_CLUSTERS, OUTPUT_DIM)

    edge_index, batch, deg_idx = make_example_graph()
    deg_idx = jnp.clip(deg_idx, 0, MAX_DEGREE)
    num_graphs = 2

    out = gin_encoder_forward(params, deg_idx, edge_index, batch, num_graphs)
    out = jax.block_until_ready(out)
    assert out.shape == (num_graphs, NUM_CLUSTERS, OUTPUT_DIM)

    ref = reference_forward(params, deg_idx, edge_index, batch, num_graphs)
    ref = jax.block_until_ready(ref)
    # bf16 MXU operands (f32 accumulation) vs f32 HIGHEST reference: tolerance
    # loosened accordingly (values are O(1)).
    assert jnp.allclose(out, ref, rtol=4e-2, atol=4e-2), (
        f"max abs err {jnp.max(jnp.abs(out - ref))}")

    print("KERNEL_OK")
</pallas_src>

<mosaic_0001>
module attributes {stable_mosaic.version = 11 : i64} {
  func.func @kernel(%arg0: memref<128x128xbf16, #tpu.memory_space<vmem>>, %arg1: memref<128x128xbf16, #tpu.memory_space<vmem>>, %arg2: memref<2x128x128xbf16, #tpu.memory_space<vmem>>, %arg3: memref<2x1x128xf32, #tpu.memory_space<vmem>>, %arg4: memref<2x128x128xbf16, #tpu.memory_space<vmem>>, %arg5: memref<2x1x128xf32, #tpu.memory_space<vmem>>, %arg6: memref<2x1x128xf32, #tpu.memory_space<vmem>>, %arg7: memref<2x1x128xf32, #tpu.memory_space<vmem>>, %arg8: memref<8x128xbf16, #tpu.memory_space<vmem>>, %arg9: memref<128x8xbf16, #tpu.memory_space<vmem>>, %arg10: memref<8x1xf32, #tpu.memory_space<vmem>>, %arg11: memref<128x128xbf16, #tpu.memory_space<vmem>>, %arg12: memref<1x128xf32, #tpu.memory_space<vmem>>, %arg13: memref<8x128xf32, #tpu.memory_space<vmem>>) attributes {dimension_semantics = [], scalar_prefetch = 0 : i64, scratch_operands = 0 : i64, tpu.core_type = #tpu.core_type<tc>} {
    %c0 = arith.constant 0 : index
    %c0_0 = arith.constant 0 : index
    %0 = vector.load %arg1[%c0, %c0_0] : memref<128x128xbf16, #tpu.memory_space<vmem>>, vector<128x128xbf16>
    %c0_1 = arith.constant 0 : index
    %c0_2 = arith.constant 0 : index
    %1 = vector.load %arg0[%c0_1, %c0_2] : memref<128x128xbf16, #tpu.memory_space<vmem>>, vector<128x128xbf16>
    %cst = arith.constant dense<0.000000e+00> : vector<128x128xf32>
    %2 = tpu.matmul %1, %0, %cst {dimension_numbers = #tpu.dot_dimension_numbers<[1], [0], [0], [1], [0, 0, 1, 1], [], []>} : vector<128x128xbf16>, vector<128x128xbf16>, vector<128x128xf32> -> vector<128x128xf32>
    %3 = arith.truncf %2 : vector<128x128xf32> to vector<128x128xbf16>
    %c0_3 = arith.constant 0 : index
    %c0_4 = arith.constant 0 : index
    %c0_5 = arith.constant 0 : index
    %4 = vector.load %arg2[%c0_3, %c0_4, %c0_5] : memref<2x128x128xbf16, #tpu.memory_space<vmem>>, vector<1x128x128xbf16>
    %5 = vector.shape_cast %4 : vector<1x128x128xbf16> to vector<128x128xbf16>
    %cst_6 = arith.constant dense<0.000000e+00> : vector<128x128xf32>
    %6 = tpu.matmul %3, %5, %cst_6 {dimension_numbers = #tpu.dot_dimension_numbers<[1], [0], [0], [1], [0, 0, 1, 1], [], []>} : vector<128x128xbf16>, vector<128x128xbf16>, vector<128x128xf32> -> vector<128x128xf32>
    %c0_7 = arith.constant 0 : index
    %c0_8 = arith.constant 0 : index
    %c0_9 = arith.constant 0 : index
    %7 = vector.load %arg3[%c0_7, %c0_8, %c0_9] : memref<2x1x128xf32, #tpu.memory_space<vmem>>, vector<1x1x128xf32>
    %8 = vector.shape_cast %7 : vector<1x1x128xf32> to vector<1x128xf32>
    %9 = vector.broadcast %8 : vector<1x128xf32> to vector<128x128xf32>
    %10 = arith.addf %6, %9 : vector<128x128xf32>
    %cst_10 = arith.constant 0.000000e+00 : f32
    %11 = vector.broadcast %cst_10 : f32 to vector<128x128xf32>
    %12 = arith.maximumf %10, %11 : vector<128x128xf32>
    %13 = arith.truncf %12 : vector<128x128xf32> to vector<128x128xbf16>
    %c0_11 = arith.constant 0 : index
    %c0_12 = arith.constant 0 : index
    %c0_13 = arith.constant 0 : index
    %14 = vector.load %arg4[%c0_11, %c0_12, %c0_13] : memref<2x128x128xbf16, #tpu.memory_space<vmem>>, vector<1x128x128xbf16>
    %15 = vector.shape_cast %14 : vector<1x128x128xbf16> to vector<128x128xbf16>
    %cst_14 = arith.constant dense<0.000000e+00> : vector<128x128xf32>
    %16 = tpu.matmul %13, %15, %cst_14 {dimension_numbers = #tpu.dot_dimension_numbers<[1], [0], [0], [1], [0, 0, 1, 1], [], []>} : vector<128x128xbf16>, vector<128x128xbf16>, vector<128x128xf32> -> vector<128x128xf32>
    %c0_15 = arith.constant 0 : index
    %c0_16 = arith.constant 0 : index
    %c0_17 = arith.constant 0 : index
    %17 = vector.load %arg5[%c0_15, %c0_16, %c0_17] : memref<2x1x128xf32, #tpu.memory_space<vmem>>, vector<1x1x128xf32>
    %18 = vector.shape_cast %17 : vector<1x1x128xf32> to vector<1x128xf32>
    %19 = vector.broadcast %18 : vector<1x128xf32> to vector<128x128xf32>
    %20 = arith.addf %16, %19 : vector<128x128xf32>
    %c0_18 = arith.constant 0 : index
    %c0_19 = arith.constant 0 : index
    %c0_20 = arith.constant 0 : index
    %21 = vector.load %arg6[%c0_18, %c0_19, %c0_20] : memref<2x1x128xf32, #tpu.memory_space<vmem>>, vector<1x1x128xf32>
    %22 = vector.shape_cast %21 : vector<1x1x128xf32> to vector<1x128xf32>
    %23 = vector.broadcast %22 : vector<1x128xf32> to vector<128x128xf32>
    %24 = arith.mulf %20, %23 : vector<128x128xf32>
    %c0_21 = arith.constant 0 : index
    %c0_22 = arith.constant 0 : index
    %c0_23 = arith.constant 0 : index
    %25 = vector.load %arg7[%c0_21, %c0_22, %c0_23] : memref<2x1x128xf32, #tpu.memory_space<vmem>>, vector<1x1x128xf32>
    %26 = vector.shape_cast %25 : vector<1x1x128xf32> to vector<1x128xf32>
    %27 = vector.broadcast %26 : vector<1x128xf32> to vector<128x128xf32>
    %28 = arith.addf %24, %27 : vector<128x128xf32>
    %cst_24 = arith.constant 0.000000e+00 : f32
    %29 = vector.broadcast %cst_24 : f32 to vector<128x128xf32>
    %30 = arith.maximumf %28, %29 : vector<128x128xf32>
    %31 = arith.truncf %30 : vector<128x128xf32> to vector<128x128xbf16>
    %cst_25 = arith.constant dense<0.000000e+00> : vector<128x128xf32>
    %32 = tpu.matmul %1, %31, %cst_25 {dimension_numbers = #tpu.dot_dimension_numbers<[1], [0], [0], [1], [0, 0, 1, 1], [], []>} : vector<128x128xbf16>, vector<128x128xbf16>, vector<128x128xf32> -> vector<128x128xf32>
    %33 = arith.truncf %32 : vector<128x128xf32> to vector<128x128xbf16>
    %c1 = arith.constant 1 : index
    %c0_26 = arith.constant 0 : index
    %c0_27 = arith.constant 0 : index
    %34 = vector.load %arg2[%c1, %c0_26, %c0_27] : memref<2x128x128xbf16, #tpu.memory_space<vmem>>, vector<1x128x128xbf16>
    %35 = vector.shape_cast %34 : vector<1x128x128xbf16> to vector<128x128xbf16>
    %cst_28 = arith.constant dense<0.000000e+00> : vector<128x128xf32>
    %36 = tpu.matmul %33, %35, %cst_28 {dimension_numbers = #tpu.dot_dimension_numbers<[1], [0], [0], [1], [0, 0, 1, 1], [], []>} : vector<128x128xbf16>, vector<128x128xbf16>, vector<128x128xf32> -> vector<128x128xf32>
    %c1_29 = arith.constant 1 : index
    %c0_30 = arith.constant 0 : index
    %c0_31 = arith.constant 0 : index
    %37 = vector.load %arg3[%c1_29, %c0_30, %c0_31] : memref<2x1x128xf32, #tpu.memory_space<vmem>>, vector<1x1x128xf32>
    %38 = vector.shape_cast %37 : vector<1x1x128xf32> to vector<1x128xf32>
    %39 = vector.broadcast %38 : vector<1x128xf32> to vector<128x128xf32>
    %40 = arith.addf %36, %39 : vector<128x128xf32>
    %cst_32 = arith.constant 0.000000e+00 : f32
    %41 = vector.broadcast %cst_32 : f32 to vector<128x128xf32>
    %42 = arith.maximumf %40, %41 : vector<128x128xf32>
    %43 = arith.truncf %42 : vector<128x128xf32> to vector<128x128xbf16>
    %c1_33 = arith.constant 1 : index
    %c0_34 = arith.constant 0 : index
    %c0_35 = arith.constant 0 : index
    %44 = vector.load %arg4[%c1_33, %c0_34, %c0_35] : memref<2x128x128xbf16, #tpu.memory_space<vmem>>, vector<1x128x128xbf16>
    %45 = vector.shape_cast %44 : vector<1x128x128xbf16> to vector<128x128xbf16>
    %cst_36 = arith.constant dense<0.000000e+00> : vector<128x128xf32>
    %46 = tpu.matmul %43, %45, %cst_36 {dimension_numbers = #tpu.dot_dimension_numbers<[1], [0], [0], [1], [0, 0, 1, 1], [], []>} : vector<128x128xbf16>, vector<128x128xbf16>, vector<128x128xf32> -> vector<128x128xf32>
    %c1_37 = arith.constant 1 : index
    %c0_38 = arith.constant 0 : index
    %c0_39 = arith.constant 0 : index
    %47 = vector.load %arg5[%c1_37, %c0_38, %c0_39] : memref<2x1x128xf32, #tpu.memory_space<vmem>>, vector<1x1x128xf32>
    %48 = vector.shape_cast %47 : vector<1x1x128xf32> to vector<1x128xf32>
    %49 = vector.broadcast %48 : vector<1x128xf32> to vector<128x128xf32>
    %50 = arith.addf %46, %49 : vector<128x128xf32>
    %c1_40 = arith.constant 1 : index
    %c0_41 = arith.constant 0 : index
    %c0_42 = arith.constant 0 : index
    %51 = vector.load %arg6[%c1_40, %c0_41, %c0_42] : memref<2x1x128xf32, #tpu.memory_space<vmem>>, vector<1x1x128xf32>
    %52 = vector.shape_cast %51 : vector<1x1x128xf32> to vector<1x128xf32>
    %53 = vector.broadcast %52 : vector<1x128xf32> to vector<128x128xf32>
    %54 = arith.mulf %50, %53 : vector<128x128xf32>
    %c1_43 = arith.constant 1 : index
    %c0_44 = arith.constant 0 : index
    %c0_45 = arith.constant 0 : index
    %55 = vector.load %arg7[%c1_43, %c0_44, %c0_45] : memref<2x1x128xf32, #tpu.memory_space<vmem>>, vector<1x1x128xf32>
    %56 = vector.shape_cast %55 : vector<1x1x128xf32> to vector<1x128xf32>
    %57 = vector.broadcast %56 : vector<1x128xf32> to vector<128x128xf32>
    %58 = arith.addf %54, %57 : vector<128x128xf32>
    %cst_46 = arith.constant 0.000000e+00 : f32
    %59 = vector.broadcast %cst_46 : f32 to vector<128x128xf32>
    %60 = arith.maximumf %58, %59 : vector<128x128xf32>
    %61 = arith.truncf %60 : vector<128x128xf32> to vector<128x128xbf16>
    %c0_47 = arith.constant 0 : index
    %c0_48 = arith.constant 0 : index
    %62 = vector.load %arg9[%c0_47, %c0_48] : memref<128x8xbf16, #tpu.memory_space<vmem>>, vector<128x8xbf16>
    %cst_49 = arith.constant dense<0.000000e+00> : vector<8x128xf32>
    %63 = tpu.matmul %62, %61, %cst_49 {dimension_numbers = #tpu.dot_dimension_numbers<[0], [1], [1], [0], [0, 1, 1, 0], [], []>} : vector<128x8xbf16>, vector<128x128xbf16>, vector<8x128xf32> -> vector<8x128xf32>
    %c0_50 = arith.constant 0 : index
    %c0_51 = arith.constant 0 : index
    %64 = vector.load %arg10[%c0_50, %c0_51] : memref<8x1xf32, #tpu.memory_space<vmem>>, vector<8x1xf32>
    %65 = vector.broadcast %64 : vector<8x1xf32> to vector<8x128xf32>
    %66 = arith.addf %63, %65 : vector<8x128xf32>
    %c0_52 = arith.constant 0 : index
    %c0_53 = arith.constant 0 : index
    %67 = vector.load %arg8[%c0_52, %c0_53] : memref<8x128xbf16, #tpu.memory_space<vmem>>, vector<8x128xbf16>
    %68 = arith.extf %67 : vector<8x128xbf16> to vector<8x128xf32>
    %cst_54 = arith.constant 0.000000e+00 : f32
    %69 = vector.broadcast %cst_54 : f32 to vector<8x128xf32>
    %70 = arith.cmpf ogt, %68, %69 : vector<8x128xf32>
    %cst_55 = arith.constant -1.000000e+30 : f32
    %71 = vector.broadcast %cst_55 : f32 to vector<8x128xf32>
    %72 = arith.select %70, %66, %71 : vector<8x128xi1>, vector<8x128xf32>
    %cst_56 = arith.constant dense<0xFF800000> : vector<8xf32>
    %73 = vector.multi_reduction <maximumf>, %72, %cst_56 [1] : vector<8x128xf32> to vector<8xf32>
    %74 = vector.shape_cast %73 : vector<8xf32> to vector<8x1xf32>
    %cst_57 = arith.constant 0.000000e+00 : f32
    %75 = vector.broadcast %cst_57 : f32 to vector<8x128xf32>
    %76 = arith.cmpf ogt, %68, %75 : vector<8x128xf32>
    %77 = vector.broadcast %74 : vector<8x1xf32> to vector<8x128xf32>
    %78 = arith.subf %66, %77 : vector<8x128xf32>
    %cst_58 = arith.constant -1.000000e+30 : f32
    %79 = vector.broadcast %cst_58 : f32 to vector<8x128xf32>
    %80 = arith.select %76, %78, %79 : vector<8x128xi1>, vector<8x128xf32>
    %81 = math.exp %80 : vector<8x128xf32>
    %cst_59 = arith.constant dense<0.000000e+00> : vector<8xf32>
    %82 = vector.multi_reduction <add>, %81, %cst_59 [1] : vector<8x128xf32> to vector<8xf32>
    %83 = vector.shape_cast %82 : vector<8xf32> to vector<8x1xf32>
    %84 = arith.truncf %81 : vector<8x128xf32> to vector<8x128xbf16>
    %cst_60 = arith.constant dense<0.000000e+00> : vector<8x128xf32>
    %85 = tpu.matmul %84, %61, %cst_60 {dimension_numbers = #tpu.dot_dimension_numbers<[1], [0], [0], [1], [0, 0, 1, 1], [], []>} : vector<8x128xbf16>, vector<128x128xbf16>, vector<8x128xf32> -> vector<8x128xf32>
    %cst_61 = arith.constant 1.000000e-30 : f32
    %86 = vector.broadcast %cst_61 : f32 to vector<8x1xf32>
    %87 = arith.maximumf %83, %86 : vector<8x1xf32>
    %88 = vector.broadcast %87 : vector<8x1xf32> to vector<8x128xf32>
    %89 = arith.divf %85, %88 : vector<8x128xf32>
    %90 = arith.truncf %89 : vector<8x128xf32> to vector<8x128xbf16>
    %c0_62 = arith.constant 0 : index
    %c0_63 = arith.constant 0 : index
    %91 = vector.load %arg11[%c0_62, %c0_63] : memref<128x128xbf16, #tpu.memory_space<vmem>>, vector<128x128xbf16>
    %cst_64 = arith.constant dense<0.000000e+00> : vector<8x128xf32>
    %92 = tpu.matmul %90, %91, %cst_64 {dimension_numbers = #tpu.dot_dimension_numbers<[1], [0], [0], [1], [0, 0, 1, 1], [], []>} : vector<8x128xbf16>, vector<128x128xbf16>, vector<8x128xf32> -> vector<8x128xf32>
    %c0_65 = arith.constant 0 : index
    %c0_66 = arith.constant 0 : index
    %93 = vector.load %arg12[%c0_65, %c0_66] : memref<1x128xf32, #tpu.memory_space<vmem>>, vector<1x128xf32>
    %94 = vector.broadcast %93 : vector<1x128xf32> to vector<8x128xf32>
    %95 = arith.addf %92, %94 : vector<8x128xf32>
    %c0_67 = arith.constant 0 : index
    %c0_68 = arith.constant 0 : index
    %96 = vector.load %arg13[%c0_67, %c0_68] : memref<8x128xf32, #tpu.memory_space<vmem>>, vector<8x128xf32>
    tpu.vector_store %arg13[%c0_67, %c0_68], %95 {strides = array<i32>} : memref<8x128xf32, #tpu.memory_space<vmem>>, vector<8x128xf32>,
    return
  }
}

</mosaic_0001>

<llo_original>
// kernel: tpu_custom_call.1
$region0: #{tpu_custom_call.1}
  #allocation0 [shape = 'u32[]', space=smem, size = 0x4, offset = 0x4, fixed_abs, tag = 'smem constant byte address 0x4 - core index']
  #allocation1 [shape = 'u32[72,128]{1,0:T(1,128)}', space=vmem, size = 0x9000, scoped, tag = 'internal scratch']
  %s0 = inlined_call_operand.vmem [shape: bf16[128,128], index: 0, kind: input, shape index: {}]
  %s1 = inlined_call_operand.hbm [shape: bf16[128,128], index: 1, kind: input, shape index: {}]
  %s2 = inlined_call_operand.hbm [shape: bf16[2,128,128], index: 2, kind: input, shape index: {}]
  %s3 = inlined_call_operand.vmem [shape: f32[2,1,128], index: 3, kind: input, shape index: {}]
  %s4 = inlined_call_operand.hbm [shape: bf16[2,128,128], index: 4, kind: input, shape index: {}]
  %s5 = inlined_call_operand.vmem [shape: f32[2,1,128], index: 5, kind: input, shape index: {}]
  %s6 = inlined_call_operand.vmem [shape: f32[2,1,128], index: 6, kind: input, shape index: {}]
  %s7 = inlined_call_operand.vmem [shape: f32[2,1,128], index: 7, kind: input, shape index: {}]
  %s8 = inlined_call_operand.vmem [shape: bf16[8,128], index: 8, kind: input, shape index: {}]
  %s9 = inlined_call_operand.vmem [shape: bf16[128,8], index: 9, kind: input, shape index: {}]
  %s10 = inlined_call_operand.vmem [shape: f32[8,1], index: 10, kind: input, shape index: {}]
  %s11 = inlined_call_operand.hbm [shape: bf16[128,128], index: 11, kind: input, shape index: {}]
  %s12 = inlined_call_operand.vmem [shape: f32[1,128], index: 12, kind: input, shape index: {}]
  %s13 = inlined_call_operand.hbm [shape: f32[8,128], index: 13, kind: output, shape index: {}]
  %s14 = sld [smem:[#allocation0]]
  $region78: #{tpu_custom_call.1} parent=0
    _
  %s16 = ssub.s32 1, %s14
  %s17 = scalar_select 0, %s16, %s14
  $region1: #{tpu_custom_call.1} parent=0
    #allocation2 [shape = 'u8[32768]{0}', space=vmem, size = 0x8000, scoped, tag = 'input window, operand 1, single buffered']
    #allocation3 [shape = 's32[1]{0}', space=sflag, size = 0x4, scoped, tag = 'scoped memory for tpu_custom_call.1']
    #allocation4 [shape = 's32[1]{0}', space=sflag, size = 0x4, scoped, tag = 'scoped memory for tpu_custom_call.1']
    #allocation5 [shape = 'u8[65536]{0}', space=vmem, size = 0x10000, scoped, tag = 'input window, operand 2, single buffered']
    #allocation6 [shape = 's32[1]{0}', space=sflag, size = 0x4, scoped, tag = 'scoped memory for tpu_custom_call.1']
    #allocation7 [shape = 'u8[65536]{0}', space=vmem, size = 0x10000, scoped, tag = 'input window, operand 4, single buffered']
    #allocation8 [shape = 'u8[32768]{0}', space=vmem, size = 0x8000, scoped, tag = 'input window, operand 11, single buffered']
    #allocation9 [shape = 's32[1]{0}', space=sflag, size = 0x4, scoped, tag = 'scoped memory for tpu_custom_call.1']
    #allocation10 [shape = 'u8[4096]{0}', space=vmem, size = 0x1000, scoped, tag = 'output window, operand 0, single buffered']
    %18 = vsyncpa [#allocation3], 0
    %19 = vsyncpa [#allocation6], 0
    %20 = vsyncpa [#allocation9], 0
    %21 = vsyncpa [#allocation4], 0
    // Predicated region
    $region2: #{tpu_custom_call.1} parent=1 // pred_check
      _
    $region3: #{tpu_custom_call.1} parent=1 // pred_check_branch
      %23 = sbr.rel (0) target = $region5
    $region4: #{tpu_custom_call.1} parent=1 // pred_region
      _
    $region5: #{tpu_custom_call.1} parent=1 // pred_fallthru
      _
    // Predicated region
    $region6: #{tpu_custom_call.1} parent=1 // pred_check
      _
    $region7: #{tpu_custom_call.1} parent=1 // pred_check_branch
      %25 = sbr.rel (0) target = $region9
    $region8: #{tpu_custom_call.1} parent=1 // pred_region
      %27 = vsyncadd [#allocation3], 0
      %s28 = sshll.u32 %s1, 4
      %s29 = int_to_ptr.hbm [resolvable:$true] %s28
      %s30 = sshll.u32 [#allocation2], 4
      %s31 = int_to_ptr.vmem [resolvable:$true] %s30
      %36 = dma.hbm_to_vmem [thread:$0]  %s29, 1024, %s31, [#allocation3], 64, 64, 4
    $region9: #{tpu_custom_call.1} parent=1 // pred_fallthru
      _
    // Predicated region
    $region10: #{tpu_custom_call.1} parent=1 // pred_check
      _
    $region11: #{tpu_custom_call.1} parent=1 // pred_check_branch
      %38 = sbr.rel (0) target = $region13
    $region12: #{tpu_custom_call.1} parent=1 // pred_region
      %40 = vsyncadd [#allocation6], 0
      %s41 = sshll.u32 %s2, 4
      %s42 = int_to_ptr.hbm [resolvable:$true] %s41
      %s43 = sshll.u32 [#allocation5], 4
      %s44 = int_to_ptr.vmem [resolvable:$true] %s43
      %49 = dma.hbm_to_vmem [thread:$0]  %s42, 2048, %s44, [#allocation6], 64, 64, 4
    $region13: #{tpu_custom_call.1} parent=1 // pred_fallthru
      _
    // Predicated region
    $region14: #{tpu_custom_call.1} parent=1 // pred_check
      _
    $region15: #{tpu_custom_call.1} parent=1 // pred_check_branch
      %51 = sbr.rel (0) target = $region17
    $region16: #{tpu_custom_call.1} parent=1 // pred_region
      _
    $region17: #{tpu_custom_call.1} parent=1 // pred_fallthru
      _
    // Predicated region
    $region18: #{tpu_custom_call.1} parent=1 // pred_check
      _
    $region19: #{tpu_custom_call.1} parent=1 // pred_check_branch
      %53 = sbr.rel (0) target = $region21
    $region20: #{tpu_custom_call.1} parent=1 // pred_region
      %55 = vsyncadd [#allocation6], 0
      %s56 = sshll.u32 %s4, 4
      %s57 = int_to_ptr.hbm [resolvable:$true] %s56
      %s58 = sshll.u32 [#allocation7], 4
      %s59 = int_to_ptr.vmem [resolvable:$true] %s58
      %64 = dma.hbm_to_vmem [thread:$0]  %s57, 2048, %s59, [#allocation6], 64, 64, 4
    $region21: #{tpu_custom_call.1} parent=1 // pred_fallthru
      _
    // Predicated region
    $region22: #{tpu_custom_call.1} parent=1 // pred_check
      _
    $region23: #{tpu_custom_call.1} parent=1 // pred_check_branch
      %66 = sbr.rel (0) target = $region25
    $region24: #{tpu_custom_call.1} parent=1 // pred_region
      _
    $region25: #{tpu_custom_call.1} parent=1 // pred_fallthru
      _
    // Predicated region
    $region26: #{tpu_custom_call.1} parent=1 // pred_check
      _
    $region27: #{tpu_custom_call.1} parent=1 // pred_check_branch
      %68 = sbr.rel (0) target = $region29
    $region28: #{tpu_custom_call.1} parent=1 // pred_region
      _
    $region29: #{tpu_custom_call.1} parent=1 // pred_fallthru
      _
    // Predicated region
    $region30: #{tpu_custom_call.1} parent=1 // pred_check
      _
    $region31: #{tpu_custom_call.1} parent=1 // pred_check_branch
      %70 = sbr.rel (0) target = $region33
    $region32: #{tpu_custom_call.1} parent=1 // pred_region
      _
    $region33: #{tpu_custom_call.1} parent=1 // pred_fallthru
      _
    // Predicated region
    $region34: #{tpu_custom_call.1} parent=1 // pred_check
      _
    $region35: #{tpu_custom_call.1} parent=1 // pred_check_branch
      %72 = sbr.rel (0) target = $region37
    $region36: #{tpu_custom_call.1} parent=1 // pred_region
      _
    $region37: #{tpu_custom_call.1} parent=1 // pred_fallthru
      _
    // Predicated region
    $region38: #{tpu_custom_call.1} parent=1 // pred_check
      _
    $region39: #{tpu_custom_call.1} parent=1 // pred_check_branch
      %74 = sbr.rel (0) target = $region41
    $region40: #{tpu_custom_call.1} parent=1 // pred_region
      _
    $region41: #{tpu_custom_call.1} parent=1 // pred_fallthru
      _
    // Predicated region
    $region42: #{tpu_custom_call.1} parent=1 // pred_check
      _
    $region43: #{tpu_custom_call.1} parent=1 // pred_check_branch
      %76 = sbr.rel (0) target = $region45
    $region44: #{tpu_custom_call.1} parent=1 // pred_region
      _
    $region45: #{tpu_custom_call.1} parent=1 // pred_fallthru
      _
    // Predicated region
    $region46: #{tpu_custom_call.1} parent=1 // pred_check
      _
    $region47: #{tpu_custom_call.1} parent=1 // pred_check_branch
      %78 = sbr.rel (0) target = $region49
    $region48: #{tpu_custom_call.1} parent=1 // pred_region
      %80 = vsyncadd [#allocation9], 0
      %s81 = sshll.u32 %s11, 4
      %s82 = int_to_ptr.hbm [resolvable:$true] %s81
      %s83 = sshll.u32 [#allocation8], 4
      %s84 = int_to_ptr.vmem [resolvable:$true] %s83
      %89 = dma.hbm_to_vmem [thread:$0]  %s82, 1024, %s84, [#allocation9], 64, 64, 4
    $region49: #{tpu_custom_call.1} parent=1 // pred_fallthru
      _
    // Predicated region
    $region50: #{tpu_custom_call.1} parent=1 // pred_check
      _
    $region51: #{tpu_custom_call.1} parent=1 // pred_check_branch
      %91 = sbr.rel (0) target = $region53
    $region52: #{tpu_custom_call.1} parent=1 // pred_region
      _
    $region53: #{tpu_custom_call.1} parent=1 // pred_fallthru
      _
    // Predicated region
    $region54: #{tpu_custom_call.1} parent=1 // pred_check
      _
    $region55: #{tpu_custom_call.1} parent=1 // pred_check_branch
      %93 = sbr.rel (0) target = $region57
    $region56: #{tpu_custom_call.1} parent=1 // pred_region
      %95 = dma.done [#allocation3], 1024
    $region57: #{tpu_custom_call.1} parent=1 // pred_fallthru
      _
    // Predicated region
    $region58: #{tpu_custom_call.1} parent=1 // pred_check
      _
    $region59: #{tpu_custom_call.1} parent=1 // pred_check_branch
      %97 = sbr.rel (0) target = $region61
    $region60: #{tpu_custom_call.1} parent=1 // pred_region
      %99 = dma.done [#allocation6], 2048
    $region61: #{tpu_custom_call.1} parent=1 // pred_fallthru
      _
    // Predicated region
    $region62: #{tpu_custom_call.1} parent=1 // pred_check
      _
    $region63: #{tpu_custom_call.1} parent=1 // pred_check_branch
      %101 = sbr.rel (0) target = $region65
    $region64: #{tpu_custom_call.1} parent=1 // pred_region
      %103 = dma.done [#allocation6], 2048
    $region65: #{tpu_custom_call.1} parent=1 // pred_fallthru
      _
    // Predicated region
    $region66: #{tpu_custom_call.1} parent=1 // pred_check
      _
    $region67: #{tpu_custom_call.1} parent=1 // pred_check_branch
      %105 = sbr.rel (0) target = $region69
    $region68: #{tpu_custom_call.1} parent=1 // pred_region
      %107 = dma.done [#allocation9], 1024
    $region69: #{tpu_custom_call.1} parent=1 // pred_fallthru
      _
    %v108 = vld [vmem:[#allocation2] sm:$0xf]
    %v109 = vld [vmem:[#allocation2 + $0x4] sm:$0xf]
    %v110 = vld [vmem:[#allocation2 + $0x8] sm:$0xf]
    %v111 = vld [vmem:[#allocation2 + $0xc] sm:$0xf]
    %v112 = vld [vmem:[#allocation2 + $0x10] sm:$0xf]
    %v113 = vld [vmem:[#allocation2 + $0x14] sm:$0xf]
    %v114 = vld [vmem:[#allocation2 + $0x18] sm:$0xf]
    %v115 = vld [vmem:[#allocation2 + $0x1c] sm:$0xf]
    %v116 = vld [vmem:[#allocation2 + $0x20] sm:$0xf]
    %v117 = vld [vmem:[#allocation2 + $0x24] sm:$0xf]
    %v118 = vld [vmem:[#allocation2 + $0x28] sm:$0xf]
    %v119 = vld [vmem:[#allocation2 + $0x2c] sm:$0xf]
    %v120 = vld [vmem:[#allocation2 + $0x30] sm:$0xf]
    %v121 = vld [vmem:[#allocation2 + $0x34] sm:$0xf]
    %v122 = vld [vmem:[#allocation2 + $0x38] sm:$0xf]
    %v123 = vld [vmem:[#allocation2 + $0x3c] sm:$0xf]
    %v124 = vld [vmem:[%s0] sm:$0xf]
    %v125 = vld [vmem:[%s0 + $0x4] sm:$0xf]
    %v126 = vld [vmem:[%s0 + $0x8] sm:$0xf]
    %v127 = vld [vmem:[%s0 + $0xc] sm:$0xf]
    %v128 = vld [vmem:[%s0 + $0x10] sm:$0xf]
    %v129 = vld [vmem:[%s0 + $0x14] sm:$0xf]
    %v130 = vld [vmem:[%s0 + $0x18] sm:$0xf]
    %v131 = vld [vmem:[%s0 + $0x1c] sm:$0xf]
    %v132 = vld [vmem:[%s0 + $0x20] sm:$0xf]
    %v133 = vld [vmem:[%s0 + $0x24] sm:$0xf]
    %v134 = vld [vmem:[%s0 + $0x28] sm:$0xf]
    %v135 = vld [vmem:[%s0 + $0x2c] sm:$0xf]
    %v136 = vld [vmem:[%s0 + $0x30] sm:$0xf]
    %v137 = vld [vmem:[%s0 + $0x34] sm:$0xf]
    %v138 = vld [vmem:[%s0 + $0x38] sm:$0xf]
    %v139 = vld [vmem:[%s0 + $0x3c] sm:$0xf]
    %v156 = vunpack.c.l.b16 %v124
    %v157 = vunpack.c.l.b16 %v125
    %v158 = vunpack.c.l.b16 %v126
    %v159 = vunpack.c.l.b16 %v127
    %v160 = vunpack.c.l.b16 %v128
    %v161 = vunpack.c.l.b16 %v129
    %v162 = vunpack.c.l.b16 %v130
    %v163 = vunpack.c.l.b16 %v131
    %v164 = vunpack.c.l.b16 %v132
    %v165 = vunpack.c.l.b16 %v133
    %v166 = vunpack.c.l.b16 %v134
    %v167 = vunpack.c.l.b16 %v135
    %v168 = vunpack.c.l.b16 %v136
    %v169 = vunpack.c.l.b16 %v137
    %v170 = vunpack.c.l.b16 %v138
    %v171 = vunpack.c.l.b16 %v139
    %v172 = vpack.c.b16 %v157, %v156
    %v173 = vpack.c.b16 %v159, %v158
    %v174 = vpack.c.b16 %v161, %v160
    %v175 = vpack.c.b16 %v163, %v162
    %v176 = vpack.c.b16 %v165, %v164
    %v177 = vpack.c.b16 %v167, %v166
    %v178 = vpack.c.b16 %v169, %v168
    %v179 = vpack.c.b16 %v171, %v170
    %v204 = vunpack.c.l.b16 %v108
    %v205 = vunpack.c.l.b16 %v109
    %v206 = vunpack.c.l.b16 %v110
    %v207 = vunpack.c.l.b16 %v111
    %v208 = vunpack.c.l.b16 %v112
    %v209 = vunpack.c.l.b16 %v113
    %v210 = vunpack.c.l.b16 %v114
    %v211 = vunpack.c.l.b16 %v115
    %v212 = vunpack.c.l.b16 %v116
    %v213 = vunpack.c.l.b16 %v117
    %v214 = vunpack.c.l.b16 %v118
    %v215 = vunpack.c.l.b16 %v119
    %v216 = vunpack.c.l.b16 %v120
    %v217 = vunpack.c.l.b16 %v121
    %v218 = vunpack.c.l.b16 %v122
    %v219 = vunpack.c.l.b16 %v123
    %v220 = vpack.c.b16 %v205, %v204
    %v221 = vpack.c.b16 %v207, %v206
    %v222 = vpack.c.b16 %v209, %v208
    %v223 = vpack.c.b16 %v211, %v210
    %v224 = vpack.c.b16 %v213, %v212
    %v225 = vpack.c.b16 %v215, %v214
    %v226 = vpack.c.b16 %v217, %v216
    %v227 = vpack.c.b16 %v219, %v218
    %236 = vmatpush.bf16.msra.mxu0 %v227
    %237 = vmatpush.bf16.msra.mxu0 %v226
    %238 = vmatpush.bf16.msra.mxu0 %v225
    %239 = vmatpush.bf16.msra.mxu0 %v224
    %240 = vmatpush.bf16.msra.mxu0 %v223
    %241 = vmatpush.bf16.msra.mxu0 %v222
    %242 = vmatpush.bf16.msra.mxu0 %v221
    %243 = vmatpush.bf16.msra.mxu0 %v220
    %244 = vmatmul.bf16.gmra.mxu0 %v172
    %v245 = vpop.f32.mrf.mxu0
    %v246 = vadd.f32 0.0, %v245
    %v247 = vpop.f32.mrf.mxu0
    %v248 = vadd.f32 0.0, %v247
    %249 = vmatmul.bf16.gmra.mxu0 %v173
    %v250 = vpop.f32.mrf.mxu0
    %v251 = vadd.f32 0.0, %v250
    %v252 = vpop.f32.mrf.mxu0
    %v253 = vadd.f32 0.0, %v252
    %254 = vmatmul.bf16.gmra.mxu0 %v174
    %v255 = vpop.f32.mrf.mxu0
    %v256 = vadd.f32 0.0, %v255
    %v257 = vpop.f32.mrf.mxu0
    %v258 = vadd.f32 0.0, %v257
    %259 = vmatmul.bf16.gmra.mxu0 %v175
    %v260 = vpop.f32.mrf.mxu0
    %v261 = vadd.f32 0.0, %v260
    %v262 = vpop.f32.mrf.mxu0
    %v263 = vadd.f32 0.0, %v262
    %264 = vmatmul.bf16.gmra.mxu0 %v176
    %v265 = vpop.f32.mrf.mxu0
    %v266 = vadd.f32 0.0, %v265
    %v267 = vpop.f32.mrf.mxu0
    %v268 = vadd.f32 0.0, %v267
    %269 = vmatmul.bf16.gmra.mxu0 %v177
    %v270 = vpop.f32.mrf.mxu0
    %v271 = vadd.f32 0.0, %v270
    %v272 = vpop.f32.mrf.mxu0
    %v273 = vadd.f32 0.0, %v272
    %274 = vmatmul.bf16.gmra.mxu0 %v178
    %v275 = vpop.f32.mrf.mxu0
    %v276 = vadd.f32 0.0, %v275
    %v277 = vpop.f32.mrf.mxu0
    %v278 = vadd.f32 0.0, %v277
    %279 = vmatmul.bf16.gmra.mxu0 %v179
    %v280 = vpop.f32.mrf.mxu0
    %v281 = vadd.f32 0.0, %v280
    %v282 = vpop.f32.mrf.mxu0
    %v283 = vadd.f32 0.0, %v282
    %284 = vdwg.mxu0
    %v285 = vpack.c.bf16 %v248, %v246
    %v286 = vpack.c.bf16 %v253, %v251
    %v287 = vpack.c.bf16 %v258, %v256
    %v288 = vpack.c.bf16 %v263, %v261
    %v289 = vpack.c.bf16 %v268, %v266
    %v290 = vpack.c.bf16 %v273, %v271
    %v291 = vpack.c.bf16 %v278, %v276
    %v292 = vpack.c.bf16 %v283, %v281
    %v293 = vld [vmem:[#allocation5] sm:$0xf]
    %v294 = vld [vmem:[#allocation5 + $0x4] sm:$0xf]
    %v295 = vld [vmem:[#allocation5 + $0x8] sm:$0xf]
    %v296 = vld [vmem:[#allocation5 + $0xc] sm:$0xf]
    %v297 = vld [vmem:[#allocation5 + $0x10] sm:$0xf]
    %v298 = vld [vmem:[#allocation5 + $0x14] sm:$0xf]
    %v299 = vld [vmem:[#allocation5 + $0x18] sm:$0xf]
    %v300 = vld [vmem:[#allocation5 + $0x1c] sm:$0xf]
    %v301 = vld [vmem:[#allocation5 + $0x20] sm:$0xf]
    %v302 = vld [vmem:[#allocation5 + $0x24] sm:$0xf]
    %v303 = vld [vmem:[#allocation5 + $0x28] sm:$0xf]
    %v304 = vld [vmem:[#allocation5 + $0x2c] sm:$0xf]
    %v305 = vld [vmem:[#allocation5 + $0x30] sm:$0xf]
    %v306 = vld [vmem:[#allocation5 + $0x34] sm:$0xf]
    %v307 = vld [vmem:[#allocation5 + $0x38] sm:$0xf]
    %v308 = vld [vmem:[#allocation5 + $0x3c] sm:$0xf]
    %v309 = vld [vmem:[%s3] sm:$0x1]
    %v311 = vperm.slane %v309, 0
    %v329 = vunpack.c.l.b16 %v293
    %v330 = vunpack.c.l.b16 %v294
    %v331 = vunpack.c.l.b16 %v295
    %v332 = vunpack.c.l.b16 %v296
    %v333 = vunpack.c.l.b16 %v297
    %v334 = vunpack.c.l.b16 %v298
    %v335 = vunpack.c.l.b16 %v299
    %v336 = vunpack.c.l.b16 %v300
    %v337 = vunpack.c.l.b16 %v301
    %v338 = vunpack.c.l.b16 %v302
    %v339 = vunpack.c.l.b16 %v303
    %v340 = vunpack.c.l.b16 %v304
    %v341 = vunpack.c.l.b16 %v305
    %v342 = vunpack.c.l.b16 %v306
    %v343 = vunpack.c.l.b16 %v307
    %v344 = vunpack.c.l.b16 %v308
    %v345 = vpack.c.b16 %v330, %v329
    %v346 = vpack.c.b16 %v332, %v331
    %v347 = vpack.c.b16 %v334, %v333
    %v348 = vpack.c.b16 %v336, %v335
    %v349 = vpack.c.b16 %v338, %v337
    %v350 = vpack.c.b16 %v340, %v339
    %v351 = vpack.c.b16 %v342, %v341
    %v352 = vpack.c.b16 %v344, %v343
    %361 = vmatpush.bf16.msra.mxu0 %v352
    %362 = vmatpush.bf16.msra.mxu0 %v351
    %363 = vmatpush.bf16.msra.mxu0 %v350
    %364 = vmatpush.bf16.msra.mxu0 %v349
    %365 = vmatpush.bf16.msra.mxu0 %v348
    %366 = vmatpush.bf16.msra.mxu0 %v347
    %367 = vmatpush.bf16.msra.mxu0 %v346
    %368 = vmatpush.bf16.msra.mxu0 %v345
    %369 = vmatmul.bf16.gmra.mxu0 %v285
    %v370 = vpop.f32.mrf.mxu0
    %v371 = vadd.f32 %v311, %v370
    %v372 = vpop.f32.mrf.mxu0
    %v373 = vadd.f32 %v311, %v372
    %374 = vmatmul.bf16.gmra.mxu0 %v286
    %v375 = vpop.f32.mrf.mxu0
    %v376 = vadd.f32 %v311, %v375
    %v377 = vpop.f32.mrf.mxu0
    %v378 = vadd.f32 %v311, %v377
    %379 = vmatmul.bf16.gmra.mxu0 %v287
    %v380 = vpop.f32.mrf.mxu0
    %v381 = vadd.f32 %v311, %v380
    %v382 = vpop.f32.mrf.mxu0
    %v383 = vadd.f32 %v311, %v382
    %384 = vmatmul.bf16.gmra.mxu0 %v288
    %v385 = vpop.f32.mrf.mxu0
    %v386 = vadd.f32 %v311, %v385
    %v387 = vpop.f32.mrf.mxu0
    %v388 = vadd.f32 %v311, %v387
    %389 = vmatmul.bf16.gmra.mxu0 %v289
    %v390 = vpop.f32.mrf.mxu0
    %v391 = vadd.f32 %v311, %v390
    %v392 = vpop.f32.mrf.mxu0
    %v393 = vadd.f32 %v311, %v392
    %394 = vmatmul.bf16.gmra.mxu0 %v290
    %v395 = vpop.f32.mrf.mxu0
    %v396 = vadd.f32 %v311, %v395
    %v397 = vpop.f32.mrf.mxu0
    %v398 = vadd.f32 %v311, %v397
    %399 = vmatmul.bf16.gmra.mxu0 %v291
    %v400 = vpop.f32.mrf.mxu0
    %v401 = vadd.f32 %v311, %v400
    %v402 = vpop.f32.mrf.mxu0
    %v403 = vadd.f32 %v311, %v402
    %404 = vmatmul.bf16.gmra.mxu0 %v292
    %v405 = vpop.f32.mrf.mxu0
    %v406 = vadd.f32 %v311, %v405
    %v407 = vpop.f32.mrf.mxu0
    %v408 = vadd.f32 %v311, %v407
    %409 = vdwg.mxu0
    %v410 = vmax.f32 %v371, 0.0
    %v411 = vmax.f32 %v373, 0.0
    %v412 = vmax.f32 %v376, 0.0
    %v413 = vmax.f32 %v378, 0.0
    %v414 = vmax.f32 %v381, 0.0
    %v415 = vmax.f32 %v383, 0.0
    %v416 = vmax.f32 %v386, 0.0
    %v417 = vmax.f32 %v388, 0.0
    %v418 = vmax.f32 %v391, 0.0
    %v419 = vmax.f32 %v393, 0.0
    %v420 = vmax.f32 %v396, 0.0
    %v421 = vmax.f32 %v398, 0.0
    %v422 = vmax.f32 %v401, 0.0
    %v423 = vmax.f32 %v403, 0.0
    %v424 = vmax.f32 %v406, 0.0
    %v425 = vmax.f32 %v408, 0.0
    %v426 = vpack.c.bf16 %v411, %v410
    %v427 = vpack.c.bf16 %v413, %v412
    %v428 = vpack.c.bf16 %v415, %v414
    %v429 = vpack.c.bf16 %v417, %v416
    %v430 = vpack.c.bf16 %v419, %v418
    %v431 = vpack.c.bf16 %v421, %v420
    %v432 = vpack.c.bf16 %v423, %v422
    %v433 = vpack.c.bf16 %v425, %v424
    %v434 = vld [vmem:[#allocation7] sm:$0xf]
    %v435 = vld [vmem:[#allocation7 + $0x4] sm:$0xf]
    %v436 = vld [vmem:[#allocation7 + $0x8] sm:$0xf]
    %v437 = vld [vmem:[#allocation7 + $0xc] sm:$0xf]
    %v438 = vld [vmem:[#allocation7 + $0x10] sm:$0xf]
    %v439 = vld [vmem:[#allocation7 + $0x14] sm:$0xf]
    %v440 = vld [vmem:[#allocation7 + $0x18] sm:$0xf]
    %v441 = vld [vmem:[#allocation7 + $0x1c] sm:$0xf]
    %v442 = vld [vmem:[#allocation7 + $0x20] sm:$0xf]
    %v443 = vld [vmem:[#allocation7 + $0x24] sm:$0xf]
    %v444 = vld [vmem:[#allocation7 + $0x28] sm:$0xf]
    %v445 = vld [vmem:[#allocation7 + $0x2c] sm:$0xf]
    %v446 = vld [vmem:[#allocation7 + $0x30] sm:$0xf]
    %v447 = vld [vmem:[#allocation7 + $0x34] sm:$0xf]
    %v448 = vld [vmem:[#allocation7 + $0x38] sm:$0xf]
    %v449 = vld [vmem:[#allocation7 + $0x3c] sm:$0xf]
    %v450 = vld [vmem:[%s5] sm:$0x1]
    %v452 = vperm.slane %v450, 0
    %v470 = vunpack.c.l.b16 %v434
    %v471 = vunpack.c.l.b16 %v435
    %v472 = vunpack.c.l.b16 %v436
    %v473 = vunpack.c.l.b16 %v437
    %v474 = vunpack.c.l.b16 %v438
    %v475 = vunpack.c.l.b16 %v439
    %v476 = vunpack.c.l.b16 %v440
    %v477 = vunpack.c.l.b16 %v441
    %v478 = vunpack.c.l.b16 %v442
    %v479 = vunpack.c.l.b16 %v443
    %v480 = vunpack.c.l.b16 %v444
    %v481 = vunpack.c.l.b16 %v445
    %v482 = vunpack.c.l.b16 %v446
    %v483 = vunpack.c.l.b16 %v447
    %v484 = vunpack.c.l.b16 %v448
    %v485 = vunpack.c.l.b16 %v449
    %v486 = vpack.c.b16 %v471, %v470
    %v487 = vpack.c.b16 %v473, %v472
    %v488 = vpack.c.b16 %v475, %v474
    %v489 = vpack.c.b16 %v477, %v476
    %v490 = vpack.c.b16 %v479, %v478
    %v491 = vpack.c.b16 %v481, %v480
    %v492 = vpack.c.b16 %v483, %v482
    %v493 = vpack.c.b16 %v485, %v484
    %502 = vmatpush.bf16.msra.mxu0 %v493
    %503 = vmatpush.bf16.msra.mxu0 %v492
    %504 = vmatpush.bf16.msra.mxu0 %v491
    %505 = vmatpush.bf16.msra.mxu0 %v490
    %506 = vmatpush.bf16.msra.mxu0 %v489
    %507 = vmatpush.bf16.msra.mxu0 %v488
    %508 = vmatpush.bf16.msra.mxu0 %v487
    %509 = vmatpush.bf16.msra.mxu0 %v486
    %510 = vmatmul.bf16.gmra.mxu0 %v426
    %v511 = vpop.f32.mrf.mxu0
    %v512 = vadd.f32 %v452, %v511
    %v513 = vpop.f32.mrf.mxu0
    %v514 = vadd.f32 %v452, %v513
    %515 = vmatmul.bf16.gmra.mxu0 %v427
    %v516 = vpop.f32.mrf.mxu0
    %v517 = vadd.f32 %v452, %v516
    %v518 = vpop.f32.mrf.mxu0
    %v519 = vadd.f32 %v452, %v518
    %520 = vmatmul.bf16.gmra.mxu0 %v428
    %v521 = vpop.f32.mrf.mxu0
    %v522 = vadd.f32 %v452, %v521
    %v523 = vpop.f32.mrf.mxu0
    %v524 = vadd.f32 %v452, %v523
    %525 = vmatmul.bf16.gmra.mxu0 %v429
    %v526 = vpop.f32.mrf.mxu0
    %v527 = vadd.f32 %v452, %v526
    %v528 = vpop.f32.mrf.mxu0
    %v529 = vadd.f32 %v452, %v528
    %530 = vmatmul.bf16.gmra.mxu0 %v430
    %v531 = vpop.f32.mrf.mxu0
    %v532 = vadd.f32 %v452, %v531
    %v533 = vpop.f32.mrf.mxu0
    %v534 = vadd.f32 %v452, %v533
    %535 = vmatmul.bf16.gmra.mxu0 %v431
    %v536 = vpop.f32.mrf.mxu0
    %v537 = vadd.f32 %v452, %v536
    %v538 = vpop.f32.mrf.mxu0
    %v539 = vadd.f32 %v452, %v538
    %540 = vmatmul.bf16.gmra.mxu0 %v432
    %v541 = vpop.f32.mrf.mxu0
    %v542 = vadd.f32 %v452, %v541
    %v543 = vpop.f32.mrf.mxu0
    %v544 = vadd.f32 %v452, %v543
    %545 = vmatmul.bf16.gmra.mxu0 %v433
    %v546 = vpop.f32.mrf.mxu0
    %v547 = vadd.f32 %v452, %v546
    %v548 = vpop.f32.mrf.mxu0
    %v549 = vadd.f32 %v452, %v548
    %550 = vdwg.mxu0
    %v551 = vld [vmem:[%s6] sm:$0x1]
    %v553 = vperm.slane %v551, 0
    %v555 = vmul.f32 %v512, %v553
    %v556 = vmul.f32 %v514, %v553
    %v557 = vmul.f32 %v517, %v553
    %v558 = vmul.f32 %v519, %v553
    %v559 = vmul.f32 %v522, %v553
    %v560 = vmul.f32 %v524, %v553
    %v561 = vmul.f32 %v527, %v553
    %v562 = vmul.f32 %v529, %v553
    %v563 = vmul.f32 %v532, %v553
    %v564 = vmul.f32 %v534, %v553
    %v565 = vmul.f32 %v537, %v553
    %v566 = vmul.f32 %v539, %v553
    %v567 = vmul.f32 %v542, %v553
    %v568 = vmul.f32 %v544, %v553
    %v569 = vmul.f32 %v547, %v553
    %v570 = vmul.f32 %v549, %v553
    %v571 = vld [vmem:[%s7] sm:$0x1]
    %v573 = vperm.slane %v571, 0
    %v575 = vadd.f32 %v555, %v573
    %v576 = vadd.f32 %v556, %v573
    %v577 = vadd.f32 %v557, %v573
    %v578 = vadd.f32 %v558, %v573
    %v579 = vadd.f32 %v559, %v573
    %v580 = vadd.f32 %v560, %v573
    %v581 = vadd.f32 %v561, %v573
    %v582 = vadd.f32 %v562, %v573
    %v583 = vadd.f32 %v563, %v573
    %v584 = vadd.f32 %v564, %v573
    %v585 = vadd.f32 %v565, %v573
    %v586 = vadd.f32 %v566, %v573
    %v587 = vadd.f32 %v567, %v573
    %v588 = vadd.f32 %v568, %v573
    %v589 = vadd.f32 %v569, %v573
    %v590 = vadd.f32 %v570, %v573
    %v591 = vmax.f32 %v575, 0.0
    %v592 = vmax.f32 %v576, 0.0
    %v593 = vmax.f32 %v577, 0.0
    %v594 = vmax.f32 %v578, 0.0
    %v595 = vmax.f32 %v579, 0.0
    %v596 = vmax.f32 %v580, 0.0
    %v597 = vmax.f32 %v581, 0.0
    %v598 = vmax.f32 %v582, 0.0
    %v599 = vmax.f32 %v583, 0.0
    %v600 = vmax.f32 %v584, 0.0
    %v601 = vmax.f32 %v585, 0.0
    %v602 = vmax.f32 %v586, 0.0
    %v603 = vmax.f32 %v587, 0.0
    %v604 = vmax.f32 %v588, 0.0
    %v605 = vmax.f32 %v589, 0.0
    %v606 = vmax.f32 %v590, 0.0
    %v607 = vpack.c.bf16 %v592, %v591
    %v608 = vpack.c.bf16 %v594, %v593
    %v609 = vpack.c.bf16 %v596, %v595
    %v610 = vpack.c.bf16 %v598, %v597
    %v611 = vpack.c.bf16 %v600, %v599
    %v612 = vpack.c.bf16 %v602, %v601
    %v613 = vpack.c.bf16 %v604, %v603
    %v614 = vpack.c.bf16 %v606, %v605
    %615 = vmatpush.bf16.msra.mxu0 %v614
    %616 = vmatpush.bf16.msra.mxu0 %v613
    %617 = vmatpush.bf16.msra.mxu0 %v612
    %618 = vmatpush.bf16.msra.mxu0 %v611
    %619 = vmatpush.bf16.msra.mxu0 %v610
    %620 = vmatpush.bf16.msra.mxu0 %v609
    %621 = vmatpush.bf16.msra.mxu0 %v608
    %622 = vmatpush.bf16.msra.mxu0 %v607
    %623 = vmatmul.bf16.gmra.mxu0 %v172
    %v624 = vpop.f32.mrf.mxu0
    %v625 = vadd.f32 0.0, %v624
    %v626 = vpop.f32.mrf.mxu0
    %v627 = vadd.f32 0.0, %v626
    %628 = vmatmul.bf16.gmra.mxu0 %v173
    %v629 = vpop.f32.mrf.mxu0
    %v630 = vadd.f32 0.0, %v629
    %v631 = vpop.f32.mrf.mxu0
    %v632 = vadd.f32 0.0, %v631
    %633 = vmatmul.bf16.gmra.mxu0 %v174
    %v634 = vpop.f32.mrf.mxu0
    %v635 = vadd.f32 0.0, %v634
    %v636 = vpop.f32.mrf.mxu0
    %v637 = vadd.f32 0.0, %v636
    %638 = vmatmul.bf16.gmra.mxu0 %v175
    %v639 = vpop.f32.mrf.mxu0
    %v640 = vadd.f32 0.0, %v639
    %v641 = vpop.f32.mrf.mxu0
    %v642 = vadd.f32 0.0, %v641
    %643 = vmatmul.bf16.gmra.mxu0 %v176
    %v644 = vpop.f32.mrf.mxu0
    %v645 = vadd.f32 0.0, %v644
    %v646 = vpop.f32.mrf.mxu0
    %v647 = vadd.f32 0.0, %v646
    %648 = vmatmul.bf16.gmra.mxu0 %v177
    %v649 = vpop.f32.mrf.mxu0
    %v650 = vadd.f32 0.0, %v649
    %v651 = vpop.f32.mrf.mxu0
    %v652 = vadd.f32 0.0, %v651
    %653 = vmatmul.bf16.gmra.mxu0 %v178
    %v654 = vpop.f32.mrf.mxu0
    %v655 = vadd.f32 0.0, %v654
    %v656 = vpop.f32.mrf.mxu0
    %v657 = vadd.f32 0.0, %v656
    %658 = vmatmul.bf16.gmra.mxu0 %v179
    %v659 = vpop.f32.mrf.mxu0
    %v660 = vadd.f32 0.0, %v659
    %v661 = vpop.f32.mrf.mxu0
    %v662 = vadd.f32 0.0, %v661
    %663 = vdwg.mxu0
    %v664 = vpack.c.bf16 %v627, %v625
    %v665 = vpack.c.bf16 %v632, %v630
    %v666 = vpack.c.bf16 %v637, %v635
    %v667 = vpack.c.bf16 %v642, %v640
    %v668 = vpack.c.bf16 %v647, %v645
    %v669 = vpack.c.bf16 %v652, %v650
    %v670 = vpack.c.bf16 %v657, %v655
    %v671 = vpack.c.bf16 %v662, %v660
    %s672 = scalar_lea.vmem [#allocation5], 64
    %v673 = vld [vmem:[%s672] sm:$0xf]
    %v674 = vld [vmem:[%s672 + $0x4] sm:$0xf]
    %v675 = vld [vmem:[%s672 + $0x8] sm:$0xf]
    %v676 = vld [vmem:[%s672 + $0xc] sm:$0xf]
    %v677 = vld [vmem:[%s672 + $0x10] sm:$0xf]
    %v678 = vld [vmem:[%s672 + $0x14] sm:$0xf]
    %v679 = vld [vmem:[%s672 + $0x18] sm:$0xf]
    %v680 = vld [vmem:[%s672 + $0x1c] sm:$0xf]
    %v681 = vld [vmem:[%s672 + $0x20] sm:$0xf]
    %v682 = vld [vmem:[%s672 + $0x24] sm:$0xf]
    %v683 = vld [vmem:[%s672 + $0x28] sm:$0xf]
    %v684 = vld [vmem:[%s672 + $0x2c] sm:$0xf]
    %v685 = vld [vmem:[%s672 + $0x30] sm:$0xf]
    %v686 = vld [vmem:[%s672 + $0x34] sm:$0xf]
    %v687 = vld [vmem:[%s672 + $0x38] sm:$0xf]
    %v688 = vld [vmem:[%s672 + $0x3c] sm:$0xf]
    %s689 = scalar_lea.vmem %s3, 1
    %v690 = vld [vmem:[%s689] sm:$0x1]
    %v692 = vperm.slane %v690, 0
    %v710 = vunpack.c.l.b16 %v673
    %v711 = vunpack.c.l.b16 %v674
    %v712 = vunpack.c.l.b16 %v675
    %v713 = vunpack.c.l.b16 %v676
    %v714 = vunpack.c.l.b16 %v677
    %v715 = vunpack.c.l.b16 %v678
    %v716 = vunpack.c.l.b16 %v679
    %v717 = vunpack.c.l.b16 %v680
    %v718 = vunpack.c.l.b16 %v681
    %v719 = vunpack.c.l.b16 %v682
    %v720 = vunpack.c.l.b16 %v683
    %v721 = vunpack.c.l.b16 %v684
    %v722 = vunpack.c.l.b16 %v685
    %v723 = vunpack.c.l.b16 %v686
    %v724 = vunpack.c.l.b16 %v687
    %v725 = vunpack.c.l.b16 %v688
    %v726 = vpack.c.b16 %v711, %v710
    %v727 = vpack.c.b16 %v713, %v712
    %v728 = vpack.c.b16 %v715, %v714
    %v729 = vpack.c.b16 %v717, %v716
    %v730 = vpack.c.b16 %v719, %v718
    %v731 = vpack.c.b16 %v721, %v720
    %v732 = vpack.c.b16 %v723, %v722
    %v733 = vpack.c.b16 %v725, %v724
    %742 = vmatpush.bf16.msra.mxu0 %v733
    %743 = vmatpush.bf16.msra.mxu0 %v732
    %744 = vmatpush.bf16.msra.mxu0 %v731
    %745 = vmatpush.bf16.msra.mxu0 %v730
    %746 = vmatpush.bf16.msra.mxu0 %v729
    %747 = vmatpush.bf16.msra.mxu0 %v728
    %748 = vmatpush.bf16.msra.mxu0 %v727
    %749 = vmatpush.bf16.msra.mxu0 %v726
    %750 = vmatmul.bf16.gmra.mxu0 %v664
    %v751 = vpop.f32.mrf.mxu0
    %v752 = vadd.f32 %v692, %v751
    %v753 = vpop.f32.mrf.mxu0
    %v754 = vadd.f32 %v692, %v753
    %755 = vmatmul.bf16.gmra.mxu0 %v665
    %v756 = vpop.f32.mrf.mxu0
    %v757 = vadd.f32 %v692, %v756
    %v758 = vpop.f32.mrf.mxu0
    %v759 = vadd.f32 %v692, %v758
    %760 = vmatmul.bf16.gmra.mxu0 %v666
    %v761 = vpop.f32.mrf.mxu0
    %v762 = vadd.f32 %v692, %v761
    %v763 = vpop.f32.mrf.mxu0
    %v764 = vadd.f32 %v692, %v763
    %765 = vmatmul.bf16.gmra.mxu0 %v667
    %v766 = vpop.f32.mrf.mxu0
    %v767 = vadd.f32 %v692, %v766
    %v768 = vpop.f32.mrf.mxu0
    %v769 = vadd.f32 %v692, %v768
    %770 = vmatmul.bf16.gmra.mxu0 %v668
    %v771 = vpop.f32.mrf.mxu0
    %v772 = vadd.f32 %v692, %v771
    %v773 = vpop.f32.mrf.mxu0
    %v774 = vadd.f32 %v692, %v773
    %775 = vmatmul.bf16.gmra.mxu0 %v669
    %v776 = vpop.f32.mrf.mxu0
    %v777 = vadd.f32 %v692, %v776
    %v778 = vpop.f32.mrf.mxu0
    %v779 = vadd.f32 %v692, %v778
    %780 = vmatmul.bf16.gmra.mxu0 %v670
    %v781 = vpop.f32.mrf.mxu0
    %v782 = vadd.f32 %v692, %v781
    %v783 = vpop.f32.mrf.mxu0
    %v784 = vadd.f32 %v692, %v783
    %785 = vmatmul.bf16.gmra.mxu0 %v671
    %v786 = vpop.f32.mrf.mxu0
    %v787 = vadd.f32 %v692, %v786
    %v788 = vpop.f32.mrf.mxu0
    %v789 = vadd.f32 %v692, %v788
    %790 = vdwg.mxu0
    %v791 = vmax.f32 %v752, 0.0
    %v792 = vmax.f32 %v754, 0.0
    %v793 = vmax.f32 %v757, 0.0
    %v794 = vmax.f32 %v759, 0.0
    %v795 = vmax.f32 %v762, 0.0
    %v796 = vmax.f32 %v764, 0.0
    %v797 = vmax.f32 %v767, 0.0
    %v798 = vmax.f32 %v769, 0.0
    %v799 = vmax.f32 %v772, 0.0
    %v800 = vmax.f32 %v774, 0.0
    %v801 = vmax.f32 %v777, 0.0
    %v802 = vmax.f32 %v779, 0.0
    %v803 = vmax.f32 %v782, 0.0
    %v804 = vmax.f32 %v784, 0.0
    %v805 = vmax.f32 %v787, 0.0
    %v806 = vmax.f32 %v789, 0.0
    %v807 = vpack.c.bf16 %v792, %v791
    %v808 = vpack.c.bf16 %v794, %v793
    %v809 = vpack.c.bf16 %v796, %v795
    %v810 = vpack.c.bf16 %v798, %v797
    %v811 = vpack.c.bf16 %v800, %v799
    %v812 = vpack.c.bf16 %v802, %v801
    %v813 = vpack.c.bf16 %v804, %v803
    %v814 = vpack.c.bf16 %v806, %v805
    %s815 = scalar_lea.vmem [#allocation7], 64
    %v816 = vld [vmem:[%s815] sm:$0xf]
    %v817 = vld [vmem:[%s815 + $0x4] sm:$0xf]
    %v818 = vld [vmem:[%s815 + $0x8] sm:$0xf]
    %v819 = vld [vmem:[%s815 + $0xc] sm:$0xf]
    %v820 = vld [vmem:[%s815 + $0x10] sm:$0xf]
    %v821 = vld [vmem:[%s815 + $0x14] sm:$0xf]
    %v822 = vld [vmem:[%s815 + $0x18] sm:$0xf]
    %v823 = vld [vmem:[%s815 + $0x1c] sm:$0xf]
    %v824 = vld [vmem:[%s815 + $0x20] sm:$0xf]
    %v825 = vld [vmem:[%s815 + $0x24] sm:$0xf]
    %v826 = vld [vmem:[%s815 + $0x28] sm:$0xf]
    %v827 = vld [vmem:[%s815 + $0x2c] sm:$0xf]
    %v828 = vld [vmem:[%s815 + $0x30] sm:$0xf]
    %v829 = vld [vmem:[%s815 + $0x34] sm:$0xf]
    %v830 = vld [vmem:[%s815 + $0x38] sm:$0xf]
    %v831 = vld [vmem:[%s815 + $0x3c] sm:$0xf]
    %s832 = scalar_lea.vmem %s5, 1
    %v833 = vld [vmem:[%s832] sm:$0x1]
    %v835 = vperm.slane %v833, 0
    %v853 = vunpack.c.l.b16 %v816
    %v854 = vunpack.c.l.b16 %v817
    %v855 = vunpack.c.l.b16 %v818
    %v856 = vunpack.c.l.b16 %v819
    %v857 = vunpack.c.l.b16 %v820
    %v858 = vunpack.c.l.b16 %v821
    %v859 = vunpack.c.l.b16 %v822
    %v860 = vunpack.c.l.b16 %v823
    %v861 = vunpack.c.l.b16 %v824
    %v862 = vunpack.c.l.b16 %v825
    %v863 = vunpack.c.l.b16 %v826
    %v864 = vunpack.c.l.b16 %v827
    %v865 = vunpack.c.l.b16 %v828
    %v866 = vunpack.c.l.b16 %v829
    %v867 = vunpack.c.l.b16 %v830
    %v868 = vunpack.c.l.b16 %v831
    %v869 = vpack.c.b16 %v854, %v853
    %v870 = vpack.c.b16 %v856, %v855
    %v871 = vpack.c.b16 %v858, %v857
    %v872 = vpack.c.b16 %v860, %v859
    %v873 = vpack.c.b16 %v862, %v861
    %v874 = vpack.c.b16 %v864, %v863
    %v875 = vpack.c.b16 %v866, %v865
    %v876 = vpack.c.b16 %v868, %v867
    %885 = vmatpush.bf16.msra.mxu0 %v876
    %886 = vmatpush.bf16.msra.mxu0 %v875
    %887 = vmatpush.bf16.msra.mxu0 %v874
    %888 = vmatpush.bf16.msra.mxu0 %v873
    %889 = vmatpush.bf16.msra.mxu0 %v872
    %890 = vmatpush.bf16.msra.mxu0 %v871
    %891 = vmatpush.bf16.msra.mxu0 %v870
    %892 = vmatpush.bf16.msra.mxu0 %v869
    %893 = vmatmul.bf16.gmra.mxu0 %v807
    %v894 = vpop.f32.mrf.mxu0
    %v895 = vadd.f32 %v835, %v894
    %v896 = vpop.f32.mrf.mxu0
    %v897 = vadd.f32 %v835, %v896
    %898 = vmatmul.bf16.gmra.mxu0 %v808
    %v899 = vpop.f32.mrf.mxu0
    %v900 = vadd.f32 %v835, %v899
    %v901 = vpop.f32.mrf.mxu0
    %v902 = vadd.f32 %v835, %v901
    %903 = vmatmul.bf16.gmra.mxu0 %v809
    %v904 = vpop.f32.mrf.mxu0
    %v905 = vadd.f32 %v835, %v904
    %v906 = vpop.f32.mrf.mxu0
    %v907 = vadd.f32 %v835, %v906
    %908 = vmatmul.bf16.gmra.mxu0 %v810
    %v909 = vpop.f32.mrf.mxu0
    %v910 = vadd.f32 %v835, %v909
    %v911 = vpop.f32.mrf.mxu0
    %v912 = vadd.f32 %v835, %v911
    %913 = vmatmul.bf16.gmra.mxu0 %v811
    %v914 = vpop.f32.mrf.mxu0
    %v915 = vadd.f32 %v835, %v914
    %v916 = vpop.f32.mrf.mxu0
    %v917 = vadd.f32 %v835, %v916
    %918 = vmatmul.bf16.gmra.mxu0 %v812
    %v919 = vpop.f32.mrf.mxu0
    %v920 = vadd.f32 %v835, %v919
    %v921 = vpop.f32.mrf.mxu0
    %v922 = vadd.f32 %v835, %v921
    %923 = vmatmul.bf16.gmra.mxu0 %v813
    %v924 = vpop.f32.mrf.mxu0
    %v925 = vadd.f32 %v835, %v924
    %v926 = vpop.f32.mrf.mxu0
    %v927 = vadd.f32 %v835, %v926
    %928 = vmatmul.bf16.gmra.mxu0 %v814
    %v929 = vpop.f32.mrf.mxu0
    %v930 = vadd.f32 %v835, %v929
    %v931 = vpop.f32.mrf.mxu0
    %v932 = vadd.f32 %v835, %v931
    %933 = vdwg.mxu0
    %s934 = scalar_lea.vmem %s6, 1
    %v935 = vld [vmem:[%s934] sm:$0x1]
    %v937 = vperm.slane %v935, 0
    %v939 = vmul.f32 %v895, %v937
    %v940 = vmul.f32 %v897, %v937
    %v941 = vmul.f32 %v900, %v937
    %v942 = vmul.f32 %v902, %v937
    %v943 = vmul.f32 %v905, %v937
    %v944 = vmul.f32 %v907, %v937
    %v945 = vmul.f32 %v910, %v937
    %v946 = vmul.f32 %v912, %v937
    %v947 = vmul.f32 %v915, %v937
    %v948 = vmul.f32 %v917, %v937
    %v949 = vmul.f32 %v920, %v937
    %v950 = vmul.f32 %v922, %v937
    %v951 = vmul.f32 %v925, %v937
    %v952 = vmul.f32 %v927, %v937
    %v953 = vmul.f32 %v930, %v937
    %v954 = vmul.f32 %v932, %v937
    %s955 = scalar_lea.vmem %s7, 1
    %v956 = vld [vmem:[%s955] sm:$0x1]
    %v958 = vperm.slane %v956, 0
    %v960 = vadd.f32 %v939, %v958
    %v961 = vadd.f32 %v940, %v958
    %v962 = vadd.f32 %v941, %v958
    %v963 = vadd.f32 %v942, %v958
    %v964 = vadd.f32 %v943, %v958
    %v965 = vadd.f32 %v944, %v958
    %v966 = vadd.f32 %v945, %v958
    %v967 = vadd.f32 %v946, %v958
    %v968 = vadd.f32 %v947, %v958
    %v969 = vadd.f32 %v948, %v958
    %v970 = vadd.f32 %v949, %v958
    %v971 = vadd.f32 %v950, %v958
    %v972 = vadd.f32 %v951, %v958
    %v973 = vadd.f32 %v952, %v958
    %v974 = vadd.f32 %v953, %v958
    %v975 = vadd.f32 %v954, %v958
    %v976 = vmax.f32 %v960, 0.0
    %v977 = vmax.f32 %v961, 0.0
    %v978 = vmax.f32 %v962, 0.0
    %v979 = vmax.f32 %v963, 0.0
    %v980 = vmax.f32 %v964, 0.0
    %v981 = vmax.f32 %v965, 0.0
    %v982 = vmax.f32 %v966, 0.0
    %v983 = vmax.f32 %v967, 0.0
    %v984 = vmax.f32 %v968, 0.0
    %v985 = vmax.f32 %v969, 0.0
    %v986 = vmax.f32 %v970, 0.0
    %v987 = vmax.f32 %v971, 0.0
    %v988 = vmax.f32 %v972, 0.0
    %v989 = vmax.f32 %v973, 0.0
    %v990 = vmax.f32 %v974, 0.0
    %v991 = vmax.f32 %v975, 0.0
    %v992 = vpack.c.bf16 %v977, %v976
    %v993 = vpack.c.bf16 %v979, %v978
    %v994 = vpack.c.bf16 %v981, %v980
    %v995 = vpack.c.bf16 %v983, %v982
    %v996 = vpack.c.bf16 %v985, %v984
    %v997 = vpack.c.bf16 %v987, %v986
    %v998 = vpack.c.bf16 %v989, %v988
    %v999 = vpack.c.bf16 %v991, %v990
    %v1000 = vld [vmem:[%s9] sm:$0xf]
    %v1001 = vld [vmem:[%s9 + $0x4] sm:$0xf]
    %v1002 = vld [vmem:[%s9 + $0x8] sm:$0xf]
    %v1003 = vld [vmem:[%s9 + $0xc] sm:$0xf]
    %v1004 = vld [vmem:[%s9 + $0x10] sm:$0xf]
    %v1005 = vld [vmem:[%s9 + $0x14] sm:$0xf]
    %v1006 = vld [vmem:[%s9 + $0x18] sm:$0xf]
    %v1007 = vld [vmem:[%s9 + $0x1c] sm:$0xf]
    %v1008 = vld [vmem:[%s9 + $0x20] sm:$0xf]
    %v1009 = vld [vmem:[%s9 + $0x24] sm:$0xf]
    %v1010 = vld [vmem:[%s9 + $0x28] sm:$0xf]
    %v1011 = vld [vmem:[%s9 + $0x2c] sm:$0xf]
    %v1012 = vld [vmem:[%s9 + $0x30] sm:$0xf]
    %v1013 = vld [vmem:[%s9 + $0x34] sm:$0xf]
    %v1014 = vld [vmem:[%s9 + $0x38] sm:$0xf]
    %v1015 = vld [vmem:[%s9 + $0x3c] sm:$0xf]
    %v1016 = vld [vmem:[%s10] sm:$0xff]
    %1018 = vset.pattern.permute.xlu0 0
    %1019 = vperm.xlu0 %1018, %v1016
    %v1020 = vpop.permute.xlu0 %1019
    %v1038 = vunpack.c.l.b16 %v1000
    %v1039 = vunpack.c.l.b16 %v1001
    %v1040 = vunpack.c.l.b16 %v1002
    %v1041 = vunpack.c.l.b16 %v1003
    %v1042 = vunpack.c.l.b16 %v1004
    %v1043 = vunpack.c.l.b16 %v1005
    %v1044 = vunpack.c.l.b16 %v1006
    %v1045 = vunpack.c.l.b16 %v1007
    %v1046 = vunpack.c.l.b16 %v1008
    %v1047 = vunpack.c.l.b16 %v1009
    %v1048 = vunpack.c.l.b16 %v1010
    %v1049 = vunpack.c.l.b16 %v1011
    %v1050 = vunpack.c.l.b16 %v1012
    %v1051 = vunpack.c.l.b16 %v1013
    %v1052 = vunpack.c.l.b16 %v1014
    %v1053 = vunpack.c.l.b16 %v1015
    %v1054 = vpack.c.b16 %v1039, %v1038
    %v1055 = vpack.c.b16 %v1041, %v1040
    %v1056 = vpack.c.b16 %v1043, %v1042
    %v1057 = vpack.c.b16 %v1045, %v1044
    %v1058 = vpack.c.b16 %v1047, %v1046
    %v1059 = vpack.c.b16 %v1049, %v1048
    %v1060 = vpack.c.b16 %v1051, %v1050
    %v1061 = vpack.c.b16 %v1053, %v1052
    %1070 = vxpose.xlu0.c.b16.start [1/8] %v1054, 128
    %1071 = vxpose.xlu0.c.b16.cont [2/8] %v1055, 128
    %1072 = vxpose.xlu0.c.b16.cont [3/8] %v1056, 128
    %1073 = vxpose.xlu0.c.b16.cont [4/8] %v1057, 128
    %1074 = vxpose.xlu0.c.b16.cont [5/8] %v1058, 128
    %1075 = vxpose.xlu0.c.b16.cont [6/8] %v1059, 128
    %1076 = vxpose.xlu0.c.b16.cont [7/8] %v1060, 128
    %1077 = vxpose.xlu0.c.b16.end [8/8] %v1061, 128
    %v1078 = vpop.trf.xlu0
    %v1079 = vpop.trf.xlu0
    %v1080 = vpop.trf.xlu0
    %v1081 = vpop.trf.xlu0
    %v1082 = vpop.trf.xlu0
    %v1083 = vpop.trf.xlu0
    %v1084 = vpop.trf.xlu0
    %v1085 = vpop.trf.xlu0
    %1086 = vmatpush.bf16.xpose.msra.mxu0 %v999
    %1087 = vmatpush.bf16.xpose.msra.mxu0 %v998
    %1088 = vmatpush.bf16.xpose.msra.mxu0 %v997
    %1089 = vmatpush.bf16.xpose.msra.mxu0 %v996
    %1090 = vmatpush.bf16.xpose.msra.mxu0 %v995
    %1091 = vmatpush.bf16.xpose.msra.mxu0 %v994
    %1092 = vmatpush.bf16.xpose.msra.mxu0 %v993
    %1093 = vmatpush.bf16.xpose.msra.mxu0 %v992
    %1094 = vmatmul.bf16.gmra.mxu0 %v1078
    %v1095 = vpop.f32.mrf.mxu0
    %v1096 = vadd.f32 %v1020, %v1095
    %v1097 = vpop.f32.mrf.mxu0
    %1098 = vdwg.mxu0
    %v1099 = vld [vmem:[%s8] sm:$0xf]
    %v1100 = vunpack.c.l.bf16 %v1099
    %vm1101 = vcmp.gt.f32.partialorder %v1100, 0.0
    %v1102 = vsel %vm1101, %v1096, -1e+30
    %1103 = vmax.xlane.f32.xlu0 %v1102
    %v1104 = vpop.xlane.xlu0 %1103
    %v1105 = vsub.f32 %v1096, %v1104
    %v1106 = vsel %vm1101, %v1105, -1e+30
    %v1107 = vmul.f32 %v1106, 1.442695
    %v1108 = vpow.pop %v1107
    %1109 = vadd.xlane.f32.xlu0 %v1108
    %v1110 = vpop.xlane.xlu0 %1109
    %v1111 = vpack.c.bf16 %v1108, %v1108
    %1112 = vmatpush.bf16.msra.mxu0 %v999
    %1113 = vmatpush.bf16.msra.mxu0 %v998
    %1114 = vmatpush.bf16.msra.mxu0 %v997
    %1115 = vmatpush.bf16.msra.mxu0 %v996
    %1116 = vmatpush.bf16.msra.mxu0 %v995
    %1117 = vmatpush.bf16.msra.mxu0 %v994
    %1118 = vmatpush.bf16.msra.mxu0 %v993
    %1119 = vmatpush.bf16.msra.mxu0 %v992
    %1120 = vmatmul.bf16.gmra.mxu0 %v1111
    %v1121 = vpop.f32.mrf.mxu0
    %v1122 = vadd.f32 0.0, %v1121
    %v1123 = vpop.f32.mrf.mxu0
    %1124 = vdwg.mxu0
    %v1125 = vmax.f32 %v1110, 1e-30
    %v1126 = vrcp.pop %v1125
    %v1127 = vmul.f32 %v1125, %v1126
    %v1128 = vsub.f32 1.0, %v1127
    %v1129 = vmul.f32 %v1126, %v1128
    %v1130 = vadd.f32 %v1126, %v1129
    %vm1131 = vweird.f32 %v1125
    %vm1132 = vweird.f32 %v1126
    %vm1133 = vmor %vm1131, %vm1132
    %v1134 = vsel %vm1133, %v1126, %v1130
    %v1135 = vand.u32 2147483647, %v1125
    %vm1136 = vcmp.eq.f32.partialorder %v1135, 8.507059e+37
    %v1137 = vand.u32 %v1125, 2147483648
    %v1138 = vor.u32 1.1754944e-38, %v1137
    %v1139 = vsel %vm1136, %v1138, %v1134
    %v1140 = vmul.f32 %v1122, %v1139
    %v1141 = vpack.c.bf16 %v1140, %v1140
    %v1142 = vld [vmem:[#allocation8] sm:$0xf]
    %v1143 = vld [vmem:[#allocation8 + $0x4] sm:$0xf]
    %v1144 = vld [vmem:[#allocation8 + $0x8] sm:$0xf]
    %v1145 = vld [vmem:[#allocation8 + $0xc] sm:$0xf]
    %v1146 = vld [vmem:[#allocation8 + $0x10] sm:$0xf]
    %v1147 = vld [vmem:[#allocation8 + $0x14] sm:$0xf]
    %v1148 = vld [vmem:[#allocation8 + $0x18] sm:$0xf]
    %v1149 = vld [vmem:[#allocation8 + $0x1c] sm:$0xf]
    %v1150 = vld [vmem:[#allocation8 + $0x20] sm:$0xf]
    %v1151 = vld [vmem:[#allocation8 + $0x24] sm:$0xf]
    %v1152 = vld [vmem:[#allocation8 + $0x28] sm:$0xf]
    %v1153 = vld [vmem:[#allocation8 + $0x2c] sm:$0xf]
    %v1154 = vld [vmem:[#allocation8 + $0x30] sm:$0xf]
    %v1155 = vld [vmem:[#allocation8 + $0x34] sm:$0xf]
    %v1156 = vld [vmem:[#allocation8 + $0x38] sm:$0xf]
    %v1157 = vld [vmem:[#allocation8 + $0x3c] sm:$0xf]
    %v1158 = vld [vmem:[%s12] sm:$0x1]
    %v1160 = vperm.slane %v1158, 0
    %v1178 = vunpack.c.l.b16 %v1142
    %v1179 = vunpack.c.l.b16 %v1143
    %v1180 = vunpack.c.l.b16 %v1144
    %v1181 = vunpack.c.l.b16 %v1145
    %v1182 = vunpack.c.l.b16 %v1146
    %v1183 = vunpack.c.l.b16 %v1147
    %v1184 = vunpack.c.l.b16 %v1148
    %v1185 = vunpack.c.l.b16 %v1149
    %v1186 = vunpack.c.l.b16 %v1150
    %v1187 = vunpack.c.l.b16 %v1151
    %v1188 = vunpack.c.l.b16 %v1152
    %v1189 = vunpack.c.l.b16 %v1153
    %v1190 = vunpack.c.l.b16 %v1154
    %v1191 = vunpack.c.l.b16 %v1155
    %v1192 = vunpack.c.l.b16 %v1156
    %v1193 = vunpack.c.l.b16 %v1157
    %v1194 = vpack.c.b16 %v1179, %v1178
    %v1195 = vpack.c.b16 %v1181, %v1180
    %v1196 = vpack.c.b16 %v1183, %v1182
    %v1197 = vpack.c.b16 %v1185, %v1184
    %v1198 = vpack.c.b16 %v1187, %v1186
    %v1199 = vpack.c.b16 %v1189, %v1188
    %v1200 = vpack.c.b16 %v1191, %v1190
    %v1201 = vpack.c.b16 %v1193, %v1192
    %1210 = vmatpush.bf16.msra.mxu0 %v1201
    %1211 = vmatpush.bf16.msra.mxu0 %v1200
    %1212 = vmatpush.bf16.msra.mxu0 %v1199
    %1213 = vmatpush.bf16.msra.mxu0 %v1198
    %1214 = vmatpush.bf16.msra.mxu0 %v1197
    %1215 = vmatpush.bf16.msra.mxu0 %v1196
    %1216 = vmatpush.bf16.msra.mxu0 %v1195
    %1217 = vmatpush.bf16.msra.mxu0 %v1194
    %1218 = vmatmul.bf16.gmra.mxu0 %v1141
    %v1219 = vpop.f32.mrf.mxu0
    %v1220 = vadd.f32 %v1160, %v1219
    %v1221 = vpop.f32.mrf.mxu0
    %1222 = vdwg.mxu0
    %1223 = vst [vmem:[#allocation10] sm:$0xff] %v1220
    // Predicated region
    $region70: #{tpu_custom_call.1} parent=1 // pred_check
      _
    $region71: #{tpu_custom_call.1} parent=1 // pred_check_branch
      %1225 = sbr.rel (0) target = $region73
    $region72: #{tpu_custom_call.1} parent=1 // pred_region
      %1227 = vsyncadd [#allocation4], 0
      %s1229 = sshll.u32 [#allocation10], 4
      %s1230 = int_to_ptr.vmem [resolvable:$true] %s1229
      %s1231 = sshll.u32 %s13, 4
      %s1232 = int_to_ptr.hbm [resolvable:$true] %s1231
      %1234 = dma.vmem_to_hbm [thread:$0]  %s1230, 128, %s1232, [#allocation4]
    $region73: #{tpu_custom_call.1} parent=1 // pred_fallthru
      _
    // Predicated region
    $region74: #{tpu_custom_call.1} parent=1 // pred_check
      _
    $region75: #{tpu_custom_call.1} parent=1 // pred_check_branch
      %1236 = sbr.rel (0) target = $region77
    $region76: #{tpu_custom_call.1} parent=1 // pred_region
      %1238 = dma.done [#allocation4], 128
    $region77: #{tpu_custom_call.1} parent=1 // pred_fallthru
      _
    %1239 = vsyncpa [#allocation3], 1
    %1240 = vsyncpa [#allocation6], 1
    %1241 = vsyncpa [#allocation9], 1
    %1242 = vsyncpa [#allocation4], 1

</llo_original>
